<compile_context>
chip_gen: v7x
topology: tpu7x:2x2x1
jax: 0.10.0
libtpu: 0.0.40
codegen_flags: <defaults>
</compile_context>

<pallas_src>
import jax
import jax.numpy as jnp
from jax.experimental import pallas as pl
from jax.experimental.pallas import tpu as pltpu


def _round_up(x, m):
    return ((x + m - 1) // m) * m


def critic_kernel(s_ref, a_ref, w1s_ref, w1a_ref, b1_ref,
                  w2_ref, b2_ref, w3_ref, b3_ref, q_ref):
    # s: (TB, S), a: (TB, A); w1s: (S, L1) bf16, w1a: (A, L1) bf16, b1: (1, L1) f32
    # w2: (L1, L2) bf16, b2: (1, L2) f32; w3: (1, L2) f32 row; b3: (1, 1) f32
    s = s_ref[...].astype(jnp.bfloat16)
    a = a_ref[...].astype(jnp.bfloat16)

    # fc1: split matmul replaces the concat (same total K = S + A).
    h1 = (jnp.dot(s, w1s_ref[...], preferred_element_type=jnp.float32)
          + jnp.dot(a, w1a_ref[...], preferred_element_type=jnp.float32)
          + b1_ref[...])
    h1 = jnp.maximum(h1, 0.0)                                   # ReLU on VPU (f32)

    # fc2: bf16 operands, f32 accumulation.
    h2 = jnp.dot(h1.astype(jnp.bfloat16), w2_ref[...],
                 preferred_element_type=jnp.float32) + b2_ref[...]
    h2 = jnp.maximum(h2, 0.0)

    # fc3 (out_features=1): VPU multiply + XLU reduce instead of an N=1 MXU matmul.
    q = jnp.sum(h2 * w3_ref[...], axis=-1, keepdims=True) + b3_ref[...]
    q_ref[...] = q.astype(q_ref.dtype)


def critic_forward(state, action, params, *, block_b=512):
    """state: (B, S), action: (B, A) -> Q: (B, 1)."""
    w1, b1, w2, b2, w3, b3 = params
    B, S = state.shape
    A = action.shape[1]
    L2 = w2.shape[1]

    # Split fc1 weight so the wrapper concat disappears; bf16 MXU operands.
    w1_s = w1[:S].astype(jnp.bfloat16)
    w1_a = w1[S:].astype(jnp.bfloat16)
    w2_b = w2.astype(jnp.bfloat16)
    w3_row = w3.reshape(1, L2).astype(jnp.float32)   # used on VPU, keep f32

    # Batch tiling: TB multiple of 8 (sublane), pad B up to a multiple of TB.
    tb = min(block_b, _round_up(B, 8))
    b_pad = _round_up(B, tb)
    if b_pad != B:
        pad = b_pad - B
        state = jnp.pad(state, ((0, pad), (0, 0)))
        action = jnp.pad(action, ((0, pad), (0, 0)))

    batch_spec = lambda feat: pl.BlockSpec((tb, feat), lambda i: (i, 0))
    const_spec = lambda shape: pl.BlockSpec(shape, lambda i: (0, 0))

    q = pl.pallas_call(
        critic_kernel,
        out_shape=jax.ShapeDtypeStruct((b_pad, 1), jnp.float32),
        grid=(b_pad // tb,),
        in_specs=[
            batch_spec(S), batch_spec(A),
            const_spec(w1_s.shape), const_spec(w1_a.shape), const_spec(b1.shape),
            const_spec(w2_b.shape), const_spec(b2.shape),
            const_spec(w3_row.shape), const_spec(b3.shape),
        ],
        out_specs=batch_spec(1),
        compiler_params=pltpu.CompilerParams(dimension_semantics=("parallel",)),
    )(state, action, w1_s, w1_a, b1, w2_b, b2, w3_row, b3)
    return q[:B]


def init_critic_params(key, space_states_dim, space_actions_dim,
                       layer1_size=300, layer2_size=200):
    """Deterministic init mimicking nn.Linear's U(-1/sqrt(fan_in), 1/sqrt(fan_in)).
    Weights stored as (in_features, out_features) so forward is x @ W + b."""
    dims_in = [space_states_dim + space_actions_dim, layer1_size, layer2_size]
    dims_out = [layer1_size, layer2_size, 1]
    params = []
    for d_in, d_out in zip(dims_in, dims_out):
        key, kw, kb = jax.random.split(key, 3)
        bound = 1.0 / (d_in ** 0.5)
        w = jax.random.uniform(kw, (d_in, d_out), jnp.float32, -bound, bound)
        b = jax.random.uniform(kb, (1, d_out), jnp.float32, -bound, bound)
        params += [w, b]
    return tuple(params)


if __name__ == "__main__":
    key = jax.random.PRNGKey(0)
    k_state, k_action, k_params = jax.random.split(key, 3)

    batch = 2
    space_states_dim = 16
    space_actions_dim = 4

    state = jax.random.normal(k_state, (batch, space_states_dim), jnp.float32)
    action = jax.random.normal(k_action, (batch, space_actions_dim), jnp.float32)
    params = init_critic_params(k_params, space_states_dim, space_actions_dim)

    critic_fn = jax.jit(critic_forward)
    q = critic_fn(state, action, params)
    q = jax.block_until_ready(q)

    # Pure-JAX f32 reference for a sanity check of the kernel semantics.
    w1, b1, w2, b2, w3, b3 = params
    x = jnp.concatenate([state, action], axis=1)
    ref = jnp.maximum(x @ w1 + b1, 0.0)
    ref = jnp.maximum(ref @ w2 + b2, 0.0)
    ref = ref @ w3 + b3

    assert q.shape == (batch, 1)
    # Loosened tolerance vs f32 reference because matmul operands are bf16
    # (f32 accumulation); this is well within DDPG-critic accuracy needs.
    assert jnp.allclose(q, ref, atol=5e-2, rtol=5e-2)
    print("KERNEL_OK")
</pallas_src>

<mosaic_0001>
module attributes {stable_mosaic.version = 11 : i64} {
  func.func @critic_kernel(%arg0: i32, %arg1: memref<8x16xf32, #tpu.memory_space<vmem>>, %arg2: memref<8x4xf32, #tpu.memory_space<vmem>>, %arg3: memref<16x300xbf16, #tpu.memory_space<vmem>>, %arg4: memref<4x300xbf16, #tpu.memory_space<vmem>>, %arg5: memref<1x300xf32, #tpu.memory_space<vmem>>, %arg6: memref<300x200xbf16, #tpu.memory_space<vmem>>, %arg7: memref<1x200xf32, #tpu.memory_space<vmem>>, %arg8: memref<1x200xf32, #tpu.memory_space<vmem>>, %arg9: memref<1x1xf32, #tpu.memory_space<vmem>>, %arg10: memref<8x1xf32, #tpu.memory_space<vmem>>) attributes {dimension_semantics = [#tpu.dimension_semantics<parallel>], iteration_bounds = array<i64: 1>, scalar_prefetch = 0 : i64, scratch_operands = 0 : i64, tpu.core_type = #tpu.core_type<tc>, window_params = [{transform_indices = @transform_0, window_bounds = array<i64: 8, 16>}, {transform_indices = @transform_1, window_bounds = array<i64: 8, 4>}, {pipeline_mode = #tpu.pipeline_mode<synchronous>, transform_indices = @transform_2, window_bounds = array<i64: 16, 300>}, {pipeline_mode = #tpu.pipeline_mode<synchronous>, transform_indices = @transform_3, window_bounds = array<i64: 4, 300>}, {pipeline_mode = #tpu.pipeline_mode<synchronous>, transform_indices = @transform_4, window_bounds = array<i64: 1, 300>}, {pipeline_mode = #tpu.pipeline_mode<synchronous>, transform_indices = @transform_5, window_bounds = array<i64: 300, 200>}, {pipeline_mode = #tpu.pipeline_mode<synchronous>, transform_indices = @transform_6, window_bounds = array<i64: 1, 200>}, {pipeline_mode = #tpu.pipeline_mode<synchronous>, transform_indices = @transform_7, window_bounds = array<i64: 1, 200>}, {pipeline_mode = #tpu.pipeline_mode<synchronous>, transform_indices = @transform_8, window_bounds = array<i64: 1, 1>}, {transform_indices = @transform_9, window_bounds = array<i64: 8, 1>}]} {
    %c0 = arith.constant 0 : index
    %c0_0 = arith.constant 0 : index
    %0 = vector.load %arg1[%c0, %c0_0] : memref<8x16xf32, #tpu.memory_space<vmem>>, vector<8x16xf32>
    %1 = arith.truncf %0 : vector<8x16xf32> to vector<8x16xbf16>
    %c0_1 = arith.constant 0 : index
    %c0_2 = arith.constant 0 : index
    %2 = vector.load %arg2[%c0_1, %c0_2] : memref<8x4xf32, #tpu.memory_space<vmem>>, vector<8x4xf32>
    %3 = arith.truncf %2 : vector<8x4xf32> to vector<8x4xbf16>
    %c0_3 = arith.constant 0 : index
    %c0_4 = arith.constant 0 : index
    %4 = vector.load %arg3[%c0_3, %c0_4] : memref<16x300xbf16, #tpu.memory_space<vmem>>, vector<16x300xbf16>
    %cst = arith.constant dense<0.000000e+00> : vector<8x300xf32>
    %5 = tpu.matmul %1, %4, %cst {dimension_numbers = #tpu.dot_dimension_numbers<[1], [0], [0], [1], [0, 0, 1, 1], [], []>} : vector<8x16xbf16>, vector<16x300xbf16>, vector<8x300xf32> -> vector<8x300xf32>
    %c0_5 = arith.constant 0 : index
    %c0_6 = arith.constant 0 : index
    %6 = vector.load %arg4[%c0_5, %c0_6] : memref<4x300xbf16, #tpu.memory_space<vmem>>, vector<4x300xbf16>
    %cst_7 = arith.constant dense<0.000000e+00> : vector<8x300xf32>
    %7 = tpu.matmul %3, %6, %cst_7 {dimension_numbers = #tpu.dot_dimension_numbers<[1], [0], [0], [1], [0, 0, 1, 1], [], []>} : vector<8x4xbf16>, vector<4x300xbf16>, vector<8x300xf32> -> vector<8x300xf32>
    %8 = arith.addf %5, %7 : vector<8x300xf32>
    %c0_8 = arith.constant 0 : index
    %c0_9 = arith.constant 0 : index
    %9 = vector.load %arg5[%c0_8, %c0_9] : memref<1x300xf32, #tpu.memory_space<vmem>>, vector<1x300xf32>
    %10 = vector.broadcast %9 : vector<1x300xf32> to vector<8x300xf32>
    %11 = arith.addf %8, %10 : vector<8x300xf32>
    %cst_10 = arith.constant 0.000000e+00 : f32
    %12 = vector.broadcast %cst_10 : f32 to vector<8x300xf32>
    %13 = arith.maximumf %11, %12 : vector<8x300xf32>
    %14 = arith.truncf %13 : vector<8x300xf32> to vector<8x300xbf16>
    %c0_11 = arith.constant 0 : index
    %c0_12 = arith.constant 0 : index
    %15 = vector.load %arg6[%c0_11, %c0_12] : memref<300x200xbf16, #tpu.memory_space<vmem>>, vector<300x200xbf16>
    %cst_13 = arith.constant dense<0.000000e+00> : vector<8x200xf32>
    %16 = tpu.matmul %14, %15, %cst_13 {dimension_numbers = #tpu.dot_dimension_numbers<[1], [0], [0], [1], [0, 0, 1, 1], [], []>} : vector<8x300xbf16>, vector<300x200xbf16>, vector<8x200xf32> -> vector<8x200xf32>
    %c0_14 = arith.constant 0 : index
    %c0_15 = arith.constant 0 : index
    %17 = vector.load %arg7[%c0_14, %c0_15] : memref<1x200xf32, #tpu.memory_space<vmem>>, vector<1x200xf32>
    %18 = vector.broadcast %17 : vector<1x200xf32> to vector<8x200xf32>
    %19 = arith.addf %16, %18 : vector<8x200xf32>
    %cst_16 = arith.constant 0.000000e+00 : f32
    %20 = vector.broadcast %cst_16 : f32 to vector<8x200xf32>
    %21 = arith.maximumf %19, %20 : vector<8x200xf32>
    %c0_17 = arith.constant 0 : index
    %c0_18 = arith.constant 0 : index
    %22 = vector.load %arg8[%c0_17, %c0_18] : memref<1x200xf32, #tpu.memory_space<vmem>>, vector<1x200xf32>
    %23 = vector.broadcast %22 : vector<1x200xf32> to vector<8x200xf32>
    %24 = arith.mulf %21, %23 : vector<8x200xf32>
    %cst_19 = arith.constant dense<0.000000e+00> : vector<8xf32>
    %25 = vector.multi_reduction <add>, %24, %cst_19 [1] : vector<8x200xf32> to vector<8xf32>
    %26 = vector.shape_cast %25 : vector<8xf32> to vector<8x1xf32>
    %c0_20 = arith.constant 0 : index
    %c0_21 = arith.constant 0 : index
    %27 = vector.load %arg9[%c0_20, %c0_21] : memref<1x1xf32, #tpu.memory_space<vmem>>, vector<1x1xf32>
    %28 = vector.broadcast %27 : vector<1x1xf32> to vector<8x1xf32>
    %29 = arith.addf %26, %28 : vector<8x1xf32>
    %c0_22 = arith.constant 0 : index
    %c0_23 = arith.constant 0 : index
    %30 = vector.load %arg10[%c0_22, %c0_23] : memref<8x1xf32, #tpu.memory_space<vmem>>, vector<8x1xf32>
    tpu.vector_store %arg10[%c0_22, %c0_23], %29 {strides = array<i32>} : memref<8x1xf32, #tpu.memory_space<vmem>>, vector<8x1xf32>,
    return
  }
  func.func @transform_0(%arg0: i32) -> (i32, i32) {
    %c0_i32 = arith.constant 0 : i32
    %c0_i32_0 = arith.constant 0 : i32
    return %arg0, %c0_i32 : i32, i32
  }
  func.func @transform_1(%arg0: i32) -> (i32, i32) {
    %c0_i32 = arith.constant 0 : i32
    %c0_i32_0 = arith.constant 0 : i32
    return %arg0, %c0_i32 : i32, i32
  }
  func.func @transform_2(%arg0: i32) -> (i32, i32) {
    %c0_i32 = arith.constant 0 : i32
    %c0_i32_0 = arith.constant 0 : i32
    %c0_i32_1 = arith.constant 0 : i32
    return %c0_i32, %c0_i32_0 : i32, i32
  }
  func.func @transform_3(%arg0: i32) -> (i32, i32) {
    %c0_i32 = arith.constant 0 : i32
    %c0_i32_0 = arith.constant 0 : i32
    %c0_i32_1 = arith.constant 0 : i32
    return %c0_i32, %c0_i32_0 : i32, i32
  }
  func.func @transform_4(%arg0: i32) -> (i32, i32) {
    %c0_i32 = arith.constant 0 : i32
    %c0_i32_0 = arith.constant 0 : i32
    %c0_i32_1 = arith.constant 0 : i32
    return %c0_i32, %c0_i32_0 : i32, i32
  }
  func.func @transform_5(%arg0: i32) -> (i32, i32) {
    %c0_i32 = arith.constant 0 : i32
    %c0_i32_0 = arith.constant 0 : i32
    %c0_i32_1 = arith.constant 0 : i32
    return %c0_i32, %c0_i32_0 : i32, i32
  }
  func.func @transform_6(%arg0: i32) -> (i32, i32) {
    %c0_i32 = arith.constant 0 : i32
    %c0_i32_0 = arith.constant 0 : i32
    %c0_i32_1 = arith.constant 0 : i32
    return %c0_i32, %c0_i32_0 : i32, i32
  }
  func.func @transform_7(%arg0: i32) -> (i32, i32) {
    %c0_i32 = arith.constant 0 : i32
    %c0_i32_0 = arith.constant 0 : i32
    %c0_i32_1 = arith.constant 0 : i32
    return %c0_i32, %c0_i32_0 : i32, i32
  }
  func.func @transform_8(%arg0: i32) -> (i32, i32) {
    %c0_i32 = arith.constant 0 : i32
    %c0_i32_0 = arith.constant 0 : i32
    %c0_i32_1 = arith.constant 0 : i32
    return %c0_i32, %c0_i32_0 : i32, i32
  }
  func.func @transform_9(%arg0: i32) -> (i32, i32) {
    %c0_i32 = arith.constant 0 : i32
    %c0_i32_0 = arith.constant 0 : i32
    return %arg0, %c0_i32 : i32, i32
  }
}

</mosaic_0001>

<llo_original>
// kernel: critic_forward.1
$region0: #{critic_forward.1}
  #allocation0 [shape = 'u32[]', space=smem, size = 0x4, offset = 0x4, fixed_abs, tag = 'smem constant byte address 0x4 - core index']
  #allocation1 [shape = 'u32[144,128]{1,0:T(1,128)}', space=vmem, size = 0x12000, scoped, tag = 'internal scratch']
  #allocation2 [shape = 'f32[1,1]{1,0:T(1,128)S(1)}', space=vmem, size = 0x200, scoped, tag = 'scoped memory for critic_forward.1']
  %s0 = inlined_call_operand.vmem [shape: f32[8,16], index: 0, kind: input, shape index: {}]
  %s1 = inlined_call_operand.vmem [shape: f32[8,4], index: 1, kind: input, shape index: {}]
  %s2 = inlined_call_operand.vmem [shape: bf16[16,300], index: 2, kind: input, shape index: {}]
  %s3 = inlined_call_operand.vmem [shape: bf16[4,300], index: 3, kind: input, shape index: {}]
  %s4 = inlined_call_operand.vmem [shape: f32[1,300], index: 4, kind: input, shape index: {}]
  %s5 = inlined_call_operand.vmem [shape: bf16[300,200], index: 5, kind: input, shape index: {}]
  %s6 = inlined_call_operand.vmem [shape: f32[1,200], index: 6, kind: input, shape index: {}]
  %s7 = inlined_call_operand.vmem [shape: f32[1,200], index: 7, kind: input, shape index: {}]
  %s8 = inlined_call_operand.<no memory space> [shape: f32[1,1], index: 8, kind: input, shape index: {}]
  %s9 = inlined_call_operand.vmem [shape: f32[8,1], index: 9, kind: output, shape index: {}]
  %s10 = sld [smem:[#allocation0]]
  $region46: #{critic_forward.1} parent=0
    _
  %s12 = ssub.s32 1, %s10
  %s13 = scalar_select 0, %s12, %s10
  %v14 = vstv %s8
  %15 = vst [vmem:[#allocation2] sm:$0x1] %v14
  // Predicated region
  $region2: #{critic_forward.1} parent=0 // pred_check
    _
  $region3: #{critic_forward.1} parent=0 // pred_check_branch
    %17 = sbr.rel (0) target = $region5
  $region4: #{critic_forward.1} parent=0 // pred_region
    _
  $region5: #{critic_forward.1} parent=0 // pred_fallthru
    _
  // Predicated region
  $region6: #{critic_forward.1} parent=0 // pred_check
    _
  $region7: #{critic_forward.1} parent=0 // pred_check_branch
    %19 = sbr.rel (0) target = $region9
  $region8: #{critic_forward.1} parent=0 // pred_region
    _
  $region9: #{critic_forward.1} parent=0 // pred_fallthru
    _
  // Predicated region
  $region10: #{critic_forward.1} parent=0 // pred_check
    _
  $region11: #{critic_forward.1} parent=0 // pred_check_branch
    %21 = sbr.rel (0) target = $region13
  $region12: #{critic_forward.1} parent=0 // pred_region
    _
  $region13: #{critic_forward.1} parent=0 // pred_fallthru
    _
  // Predicated region
  $region14: #{critic_forward.1} parent=0 // pred_check
    _
  $region15: #{critic_forward.1} parent=0 // pred_check_branch
    %23 = sbr.rel (0) target = $region17
  $region16: #{critic_forward.1} parent=0 // pred_region
    _
  $region17: #{critic_forward.1} parent=0 // pred_fallthru
    _
  // Predicated region
  $region18: #{critic_forward.1} parent=0 // pred_check
    _
  $region19: #{critic_forward.1} parent=0 // pred_check_branch
    %25 = sbr.rel (0) target = $region21
  $region20: #{critic_forward.1} parent=0 // pred_region
    _
  $region21: #{critic_forward.1} parent=0 // pred_fallthru
    _
  // Predicated region
  $region22: #{critic_forward.1} parent=0 // pred_check
    _
  $region23: #{critic_forward.1} parent=0 // pred_check_branch
    %27 = sbr.rel (0) target = $region25
  $region24: #{critic_forward.1} parent=0 // pred_region
    _
  $region25: #{critic_forward.1} parent=0 // pred_fallthru
    _
  // Predicated region
  $region26: #{critic_forward.1} parent=0 // pred_check
    _
  $region27: #{critic_forward.1} parent=0 // pred_check_branch
    %29 = sbr.rel (0) target = $region29
  $region28: #{critic_forward.1} parent=0 // pred_region
    _
  $region29: #{critic_forward.1} parent=0 // pred_fallthru
    _
  // Predicated region
  $region30: #{critic_forward.1} parent=0 // pred_check
    _
  $region31: #{critic_forward.1} parent=0 // pred_check_branch
    %31 = sbr.rel (0) target = $region33
  $region32: #{critic_forward.1} parent=0 // pred_region
    _
  $region33: #{critic_forward.1} parent=0 // pred_fallthru
    _
  // Predicated region
  $region34: #{critic_forward.1} parent=0 // pred_check
    _
  $region35: #{critic_forward.1} parent=0 // pred_check_branch
    %33 = sbr.rel (0) target = $region37
  $region36: #{critic_forward.1} parent=0 // pred_region
    _
  $region37: #{critic_forward.1} parent=0 // pred_fallthru
    _
  %v35 = vld [vmem:[%s0] sm:$0xff]
  %v36 = vpack.c.bf16 %v35, %v35
  %v37 = vld [vmem:[%s1] sm:$0xff]
  %v38 = vpack.c.bf16 %v37, %v37
  %v39 = vld [vmem:[%s2] sm:$0xff]
  %v40 = vld [vmem:[%s2 + $0x8] sm:$0xf]
  %v41 = vld [vmem:[%s2 + $0xc] sm:$0xff]
  %v42 = vld [vmem:[%s2 + $0x14] sm:$0xf]
  %v43 = vld [vmem:[%s3] sm:$0x3f]
  %v45 = vcombine.high %v43, %v43
  %v47 = vunpack.c.l.s4 1983009808
  %v48 = vunpack.c.0.s8 %v47
  %v49 = vlaneseq
  %v50 = vshrl.u32 %v49, 7
  %v51 = vsub.s32 %v48, %v50
  %v52 = vrot.slane %v43, %v51
  %v54 = vunpack.c.l.s4 1983009808
  %v55 = vunpack.c.0.s8 %v54
  %v56 = vlaneseq
  %v57 = vshrl.u32 %v56, 7
  %v58 = vsub.s32 %v55, %v57
  %v59 = vrot.slane %v45, %v58
  %v60 = vcombine.high %v52, %v52
  %vm61 = vcmask 31744
  %v63 = vsel %vm61, %v38, 0
  %vm65 = vcmask 1041408
  %v67 = vsel %vm65, %v52, 0
  %v70 = vsel %vm65, %v60, 0
  %v73 = vsel %vm65, %v59, 0
  %75 = vmatprep.subr.bf16.mxu0 %v70
  %76 = vmatpush1.bf16.msra.mxu0 %v67
  %77 = vmatprep.subr.bf16.mxu0 0
  %78 = vmatpush1.bf16.msra.mxu0 0
  %79 = vmatprep.subr.bf16.mxu0 0
  %80 = vmatpush1.bf16.msra.mxu0 0
  %81 = vmatprep.subr.bf16.mxu0 0
  %82 = vmatpush1.bf16.msra.mxu0 0
  %83 = vmatprep.subr.bf16.mxu0 0
  %84 = vmatpush1.bf16.msra.mxu0 0
  %85 = vmatprep.subr.bf16.mxu0 0
  %86 = vmatpush1.bf16.msra.mxu0 0
  %87 = vmatprep.subr.bf16.mxu0 0
  %88 = vmatpush1.bf16.msra.mxu0 0
  %89 = vmatprep.subr.bf16.mxu0 0
  %90 = vmatpush1.bf16.msra.mxu0 0
  %91 = vmatprep.subr.bf16.mxu0 0
  %92 = vmatpush1.bf16.msra.mxu0 0
  %93 = vmatprep.subr.bf16.mxu0 0
  %94 = vmatpush1.bf16.msra.mxu0 0
  %95 = vmatprep.subr.bf16.mxu0 0
  %96 = vmatpush1.bf16.msra.mxu0 0
  %97 = vmatprep.subr.bf16.mxu0 0
  %98 = vmatpush1.bf16.msra.mxu0 0
  %99 = vmatprep.subr.bf16.mxu0 0
  %100 = vmatpush1.bf16.msra.mxu0 0
  %101 = vmatprep.subr.bf16.mxu0 0
  %102 = vmatpush1.bf16.msra.mxu0 0
  %103 = vmatprep.subr.bf16.mxu0 0
  %104 = vmatpush1.bf16.msra.mxu0 0
  %105 = vmatprep.subr.bf16.mxu0 0
  %106 = vmatpush1.bf16.msra.mxu0 0
  %107 = vmatprep.mubr.bf16.mxu0 0
  %108 = vmatmul.mubr.bf16.gmra.mrb[0].mxu0 %v63
  %v109 = vpop.f32.mrb[0].mxu0
  %v110 = vadd.f32 0.0, %v109
  %v111 = vpop.f32.mrb[0].mxu0
  %v112 = vadd.f32 0.0, %v111
  %v113 = vpop.f32.mrb[0].mxu0
  %v114 = vpop.f32.mrb[0].mxu0
  %115 = vdwg.mxu0
  %116 = vmatprep.subr.bf16.mxu0 0
  %117 = vmatpush1.bf16.msra.mxu0 %v73
  %118 = vmatprep.subr.bf16.mxu0 0
  %119 = vmatpush1.bf16.msra.mxu0 0
  %120 = vmatprep.subr.bf16.mxu0 0
  %121 = vmatpush1.bf16.msra.mxu0 0
  %122 = vmatprep.subr.bf16.mxu0 0
  %123 = vmatpush1.bf16.msra.mxu0 0
  %124 = vmatprep.subr.bf16.mxu0 0
  %125 = vmatpush1.bf16.msra.mxu0 0
  %126 = vmatprep.subr.bf16.mxu0 0
  %127 = vmatpush1.bf16.msra.mxu0 0
  %128 = vmatprep.subr.bf16.mxu0 0
  %129 = vmatpush1.bf16.msra.mxu0 0
  %130 = vmatprep.subr.bf16.mxu0 0
  %131 = vmatpush1.bf16.msra.mxu0 0
  %132 = vmatprep.subr.bf16.mxu0 0
  %133 = vmatpush1.bf16.msra.mxu0 0
  %134 = vmatprep.subr.bf16.mxu0 0
  %135 = vmatpush1.bf16.msra.mxu0 0
  %136 = vmatprep.subr.bf16.mxu0 0
  %137 = vmatpush1.bf16.msra.mxu0 0
  %138 = vmatprep.subr.bf16.mxu0 0
  %139 = vmatpush1.bf16.msra.mxu0 0
  %140 = vmatprep.subr.bf16.mxu0 0
  %141 = vmatpush1.bf16.msra.mxu0 0
  %142 = vmatprep.subr.bf16.mxu0 0
  %143 = vmatpush1.bf16.msra.mxu0 0
  %144 = vmatprep.subr.bf16.mxu0 0
  %145 = vmatpush1.bf16.msra.mxu0 0
  %146 = vmatprep.subr.bf16.mxu0 0
  %147 = vmatpush1.bf16.msra.mxu0 0
  %148 = vmatprep.mubr.bf16.mxu0 0
  %149 = vmatmul.mubr.bf16.gmra.mrb[0].mxu0 %v63
  %v150 = vpop.f32.mrb[0].mxu0
  %v151 = vadd.f32 0.0, %v150
  %v152 = vpop.f32.mrb[0].mxu0
  %v153 = vpop.f32.mrb[0].mxu0
  %v154 = vpop.f32.mrb[0].mxu0
  %155 = vdwg.mxu0
  %v160 = vunpack.c.l.b16 %v39
  %v161 = vunpack.c.h.b16 %v39
  %v162 = vunpack.c.l.b16 %v40
  %v163 = vunpack.c.l.b16 %v41
  %v164 = vunpack.c.h.b16 %v41
  %v165 = vunpack.c.l.b16 %v42
  %v166 = vpack.c.b16 %v163, %v160
  %v167 = vpack.c.b16 %v164, %v161
  %v168 = vpack.c.b16 %v165, %v162
  %vm172 = vcmask 130048
  %v174 = vsel %vm172, %v36, 0
  %176 = vmatprep.subr.bf16.mxu0 %v167
  %177 = vmatpush1.bf16.msra.mxu0 %v166
  %178 = vmatprep.subr.bf16.mxu0 0
  %179 = vmatpush1.bf16.msra.mxu0 0
  %180 = vmatprep.subr.bf16.mxu0 0
  %181 = vmatpush1.bf16.msra.mxu0 0
  %182 = vmatprep.subr.bf16.mxu0 0
  %183 = vmatpush1.bf16.msra.mxu0 0
  %184 = vmatprep.subr.bf16.mxu0 0
  %185 = vmatpush1.bf16.msra.mxu0 0
  %186 = vmatprep.subr.bf16.mxu0 0
  %187 = vmatpush1.bf16.msra.mxu0 0
  %188 = vmatprep.subr.bf16.mxu0 0
  %189 = vmatpush1.bf16.msra.mxu0 0
  %190 = vmatprep.subr.bf16.mxu0 0
  %191 = vmatpush1.bf16.msra.mxu0 0
  %192 = vmatprep.subr.bf16.mxu0 0
  %193 = vmatpush1.bf16.msra.mxu0 0
  %194 = vmatprep.subr.bf16.mxu0 0
  %195 = vmatpush1.bf16.msra.mxu0 0
  %196 = vmatprep.subr.bf16.mxu0 0
  %197 = vmatpush1.bf16.msra.mxu0 0
  %198 = vmatprep.subr.bf16.mxu0 0
  %199 = vmatpush1.bf16.msra.mxu0 0
  %200 = vmatprep.subr.bf16.mxu0 0
  %201 = vmatpush1.bf16.msra.mxu0 0
  %202 = vmatprep.subr.bf16.mxu0 0
  %203 = vmatpush1.bf16.msra.mxu0 0
  %204 = vmatprep.subr.bf16.mxu0 0
  %205 = vmatpush1.bf16.msra.mxu0 0
  %206 = vmatprep.subr.bf16.mxu0 0
  %207 = vmatpush1.bf16.msra.mxu0 0
  %208 = vmatprep.mubr.bf16.mxu0 0
  %209 = vmatmul.mubr.bf16.gmra.mrb[0].mxu0 %v174
  %v210 = vpop.f32.mrb[0].mxu0
  %v211 = vadd.f32 %v110, %v210
  %v212 = vpop.f32.mrb[0].mxu0
  %v213 = vadd.f32 %v112, %v212
  %v214 = vpop.f32.mrb[0].mxu0
  %v215 = vpop.f32.mrb[0].mxu0
  %216 = vdwg.mxu0
  %217 = vmatprep.subr.bf16.mxu0 0
  %218 = vmatpush1.bf16.msra.mxu0 %v168
  %219 = vmatprep.subr.bf16.mxu0 0
  %220 = vmatpush1.bf16.msra.mxu0 0
  %221 = vmatprep.subr.bf16.mxu0 0
  %222 = vmatpush1.bf16.msra.mxu0 0
  %223 = vmatprep.subr.bf16.mxu0 0
  %224 = vmatpush1.bf16.msra.mxu0 0
  %225 = vmatprep.subr.bf16.mxu0 0
  %226 = vmatpush1.bf16.msra.mxu0 0
  %227 = vmatprep.subr.bf16.mxu0 0
  %228 = vmatpush1.bf16.msra.mxu0 0
  %229 = vmatprep.subr.bf16.mxu0 0
  %230 = vmatpush1.bf16.msra.mxu0 0
  %231 = vmatprep.subr.bf16.mxu0 0
  %232 = vmatpush1.bf16.msra.mxu0 0
  %233 = vmatprep.subr.bf16.mxu0 0
  %234 = vmatpush1.bf16.msra.mxu0 0
  %235 = vmatprep.subr.bf16.mxu0 0
  %236 = vmatpush1.bf16.msra.mxu0 0
  %237 = vmatprep.subr.bf16.mxu0 0
  %238 = vmatpush1.bf16.msra.mxu0 0
  %239 = vmatprep.subr.bf16.mxu0 0
  %240 = vmatpush1.bf16.msra.mxu0 0
  %241 = vmatprep.subr.bf16.mxu0 0
  %242 = vmatpush1.bf16.msra.mxu0 0
  %243 = vmatprep.subr.bf16.mxu0 0
  %244 = vmatpush1.bf16.msra.mxu0 0
  %245 = vmatprep.subr.bf16.mxu0 0
  %246 = vmatpush1.bf16.msra.mxu0 0
  %247 = vmatprep.subr.bf16.mxu0 0
  %248 = vmatpush1.bf16.msra.mxu0 0
  %249 = vmatprep.mubr.bf16.mxu0 0
  %250 = vmatmul.mubr.bf16.gmra.mrb[0].mxu0 %v174
  %v251 = vpop.f32.mrb[0].mxu0
  %v252 = vadd.f32 %v151, %v251
  %v253 = vpop.f32.mrb[0].mxu0
  %v254 = vpop.f32.mrb[0].mxu0
  %v255 = vpop.f32.mrb[0].mxu0
  %256 = vdwg.mxu0
  %v257 = vld [vmem:[%s4] sm:$0x7]
  %v259 = vlaneseq
  %v260 = vshrl.u32 %v259, 7
  %v261 = vsub.s32 0, %v260
  %v262 = vrot.slane %v257, %v261
  %v263 = vlaneseq
  %v264 = vshrl.u32 %v263, 7
  %v265 = vsub.s32 1, %v264
  %v266 = vrot.slane %v257, %v265
  %v267 = vlaneseq
  %v268 = vshrl.u32 %v267, 7
  %v269 = vsub.s32 2, %v268
  %v270 = vrot.slane %v257, %v269
  %v274 = vadd.f32 %v211, %v262
  %v275 = vadd.f32 %v213, %v266
  %v276 = vadd.f32 %v252, %v270
  %v277 = vmax.f32 %v274, 0.0
  %v278 = vmax.f32 %v275, 0.0
  %v279 = vmax.f32 %v276, 0.0
  %v280 = vpack.c.bf16 %v277, %v277
  %v281 = vpack.c.bf16 %v278, %v278
  %v282 = vpack.c.bf16 %v279, %v279
  %v283 = vld [vmem:[%s5] sm:$0xff]
  %v284 = vld [vmem:[%s5 + $0x8] sm:$0xff]
  %v285 = vld [vmem:[%s5 + $0x10] sm:$0xff]
  %v286 = vld [vmem:[%s5 + $0x18] sm:$0xff]
  %v287 = vld [vmem:[%s5 + $0x20] sm:$0xff]
  %v288 = vld [vmem:[%s5 + $0x28] sm:$0xff]
  %v289 = vld [vmem:[%s5 + $0x30] sm:$0xff]
  %v290 = vld [vmem:[%s5 + $0x38] sm:$0xff]
  %v291 = vld [vmem:[%s5 + $0x40] sm:$0xff]
  %v292 = vld [vmem:[%s5 + $0x48] sm:$0xff]
  %v293 = vld [vmem:[%s5 + $0x50] sm:$0xff]
  %v294 = vld [vmem:[%s5 + $0x58] sm:$0xff]
  %v295 = vld [vmem:[%s5 + $0x60] sm:$0xff]
  %v296 = vld [vmem:[%s5 + $0x68] sm:$0xff]
  %v297 = vld [vmem:[%s5 + $0x70] sm:$0xff]
  %v298 = vld [vmem:[%s5 + $0x78] sm:$0xff]
  %v299 = vld [vmem:[%s5 + $0x80] sm:$0xff]
  %v300 = vld [vmem:[%s5 + $0x88] sm:$0xff]
  %v301 = vld [vmem:[%s5 + $0x90] sm:$0xff]
  %v302 = vld [vmem:[%s5 + $0x98] sm:$0xff]
  %v303 = vld [vmem:[%s5 + $0xa0] sm:$0xff]
  %v304 = vld [vmem:[%s5 + $0xa8] sm:$0xff]
  %v305 = vld [vmem:[%s5 + $0xb0] sm:$0xff]
  %v306 = vld [vmem:[%s5 + $0xb8] sm:$0xff]
  %v307 = vld [vmem:[%s5 + $0xc0] sm:$0xff]
  %v308 = vld [vmem:[%s5 + $0xc8] sm:$0xff]
  %v309 = vld [vmem:[%s5 + $0xd0] sm:$0xff]
  %v310 = vld [vmem:[%s5 + $0xd8] sm:$0xff]
  %v311 = vld [vmem:[%s5 + $0xe0] sm:$0xff]
  %v312 = vld [vmem:[%s5 + $0xe8] sm:$0xff]
  %v313 = vld [vmem:[%s5 + $0xf0] sm:$0xff]
  %v314 = vld [vmem:[%s5 + $0xf8] sm:$0xff]
  %v315 = vld [vmem:[%s5 + $0x100] sm:$0xff]
  %v316 = vld [vmem:[%s5 + $0x108] sm:$0xff]
  %v317 = vld [vmem:[%s5 + $0x110] sm:$0xff]
  %v318 = vld [vmem:[%s5 + $0x118] sm:$0xff]
  %v319 = vld [vmem:[%s5 + $0x120] sm:$0xff]
  %v320 = vld [vmem:[%s5 + $0x128] sm:$0x33]
  %v321 = vld [vmem:[%s6] sm:$0x3]
  %v323 = vlaneseq
  %v324 = vshrl.u32 %v323, 7
  %v325 = vsub.s32 0, %v324
  %v326 = vrot.slane %v321, %v325
  %v327 = vlaneseq
  %v328 = vshrl.u32 %v327, 7
  %v329 = vsub.s32 1, %v328
  %v330 = vrot.slane %v321, %v329
  %v371 = vunpack.c.l.b16 %v283
  %v372 = vunpack.c.h.b16 %v283
  %v373 = vunpack.c.l.b16 %v284
  %v374 = vunpack.c.h.b16 %v284
  %v375 = vunpack.c.l.b16 %v285
  %v376 = vunpack.c.h.b16 %v285
  %v377 = vunpack.c.l.b16 %v286
  %v378 = vunpack.c.h.b16 %v286
  %v379 = vunpack.c.l.b16 %v287
  %v380 = vunpack.c.h.b16 %v287
  %v381 = vunpack.c.l.b16 %v288
  %v382 = vunpack.c.h.b16 %v288
  %v383 = vunpack.c.l.b16 %v289
  %v384 = vunpack.c.h.b16 %v289
  %v385 = vunpack.c.l.b16 %v290
  %v386 = vunpack.c.h.b16 %v290
  %v387 = vunpack.c.l.b16 %v291
  %v388 = vunpack.c.h.b16 %v291
  %v389 = vunpack.c.l.b16 %v292
  %v390 = vunpack.c.h.b16 %v292
  %v391 = vunpack.c.l.b16 %v293
  %v392 = vunpack.c.h.b16 %v293
  %v393 = vunpack.c.l.b16 %v294
  %v394 = vunpack.c.h.b16 %v294
  %v395 = vunpack.c.l.b16 %v295
  %v396 = vunpack.c.h.b16 %v295
  %v397 = vunpack.c.l.b16 %v296
  %v398 = vunpack.c.h.b16 %v296
  %v399 = vunpack.c.l.b16 %v297
  %v400 = vunpack.c.h.b16 %v297
  %v401 = vunpack.c.l.b16 %v298
  %v402 = vunpack.c.h.b16 %v298
  %v403 = vunpack.c.l.b16 %v299
  %v404 = vunpack.c.h.b16 %v299
  %v405 = vunpack.c.l.b16 %v300
  %v406 = vunpack.c.h.b16 %v300
  %v407 = vunpack.c.l.b16 %v301
  %v408 = vunpack.c.h.b16 %v301
  %v409 = vunpack.c.l.b16 %v302
  %v410 = vunpack.c.h.b16 %v302
  %v411 = vunpack.c.l.b16 %v303
  %v412 = vunpack.c.h.b16 %v303
  %v413 = vunpack.c.l.b16 %v304
  %v414 = vunpack.c.h.b16 %v304
  %v415 = vunpack.c.l.b16 %v305
  %v416 = vunpack.c.h.b16 %v305
  %v417 = vunpack.c.l.b16 %v306
  %v418 = vunpack.c.h.b16 %v306
  %v419 = vunpack.c.l.b16 %v307
  %v420 = vunpack.c.h.b16 %v307
  %v421 = vunpack.c.l.b16 %v308
  %v422 = vunpack.c.h.b16 %v308
  %v423 = vunpack.c.l.b16 %v309
  %v424 = vunpack.c.h.b16 %v309
  %v425 = vunpack.c.l.b16 %v310
  %v426 = vunpack.c.h.b16 %v310
  %v427 = vunpack.c.l.b16 %v311
  %v428 = vunpack.c.h.b16 %v311
  %v429 = vunpack.c.l.b16 %v312
  %v430 = vunpack.c.h.b16 %v312
  %v431 = vunpack.c.l.b16 %v313
  %v432 = vunpack.c.h.b16 %v313
  %v433 = vunpack.c.l.b16 %v314
  %v434 = vunpack.c.h.b16 %v314
  %v435 = vunpack.c.l.b16 %v315
  %v436 = vunpack.c.h.b16 %v315
  %v437 = vunpack.c.l.b16 %v316
  %v438 = vunpack.c.h.b16 %v316
  %v439 = vunpack.c.l.b16 %v317
  %v440 = vunpack.c.h.b16 %v317
  %v441 = vunpack.c.l.b16 %v318
  %v442 = vunpack.c.h.b16 %v318
  %v443 = vunpack.c.l.b16 %v319
  %v444 = vunpack.c.h.b16 %v319
  %v445 = vunpack.c.l.b16 %v320
  %v446 = vunpack.c.h.b16 %v320
  %v447 = vpack.c.b16 %v373, %v371
  %v448 = vpack.c.b16 %v374, %v372
  %v449 = vpack.c.b16 %v377, %v375
  %v450 = vpack.c.b16 %v378, %v376
  %v451 = vpack.c.b16 %v381, %v379
  %v452 = vpack.c.b16 %v382, %v380
  %v453 = vpack.c.b16 %v385, %v383
  %v454 = vpack.c.b16 %v386, %v384
  %v455 = vpack.c.b16 %v389, %v387
  %v456 = vpack.c.b16 %v390, %v388
  %v457 = vpack.c.b16 %v393, %v391
  %v458 = vpack.c.b16 %v394, %v392
  %v459 = vpack.c.b16 %v397, %v395
  %v460 = vpack.c.b16 %v398, %v396
  %v461 = vpack.c.b16 %v401, %v399
  %v462 = vpack.c.b16 %v402, %v400
  %v463 = vpack.c.b16 %v405, %v403
  %v464 = vpack.c.b16 %v406, %v404
  %v465 = vpack.c.b16 %v409, %v407
  %v466 = vpack.c.b16 %v410, %v408
  %v467 = vpack.c.b16 %v413, %v411
  %v468 = vpack.c.b16 %v414, %v412
  %v469 = vpack.c.b16 %v417, %v415
  %v470 = vpack.c.b16 %v418, %v416
  %v471 = vpack.c.b16 %v421, %v419
  %v472 = vpack.c.b16 %v422, %v420
  %v473 = vpack.c.b16 %v425, %v423
  %v474 = vpack.c.b16 %v426, %v424
  %v475 = vpack.c.b16 %v429, %v427
  %v476 = vpack.c.b16 %v430, %v428
  %v477 = vpack.c.b16 %v433, %v431
  %v478 = vpack.c.b16 %v434, %v432
  %v479 = vpack.c.b16 %v437, %v435
  %v480 = vpack.c.b16 %v438, %v436
  %v481 = vpack.c.b16 %v441, %v439
  %v482 = vpack.c.b16 %v442, %v440
  %v483 = vpack.c.b16 %v445, %v443
  %v484 = vpack.c.b16 %v446, %v444
  %vm521 = vcmask 359424
  %v523 = vsel %vm521, %v282, 0
  %vm525 = vcmask 1045504
  %v527 = vsel %vm525, %v483, 0
  %v530 = vsel %vm525, %v484, 0
  %532 = vmatprep.subr.bf16.mxu0 %v448
  %533 = vmatpush1.bf16.msra.mxu0 %v447
  %534 = vmatprep.subr.bf16.mxu0 %v450
  %535 = vmatpush1.bf16.msra.mxu0 %v449
  %536 = vmatprep.subr.bf16.mxu0 %v452
  %537 = vmatpush1.bf16.msra.mxu0 %v451
  %538 = vmatprep.subr.bf16.mxu0 %v454
  %539 = vmatpush1.bf16.msra.mxu0 %v453
  %540 = vmatprep.subr.bf16.mxu0 %v456
  %541 = vmatpush1.bf16.msra.mxu0 %v455
  %542 = vmatprep.subr.bf16.mxu0 %v458
  %543 = vmatpush1.bf16.msra.mxu0 %v457
  %544 = vmatprep.subr.bf16.mxu0 %v460
  %545 = vmatpush1.bf16.msra.mxu0 %v459
  %546 = vmatprep.subr.bf16.mxu0 %v462
  %547 = vmatpush1.bf16.msra.mxu0 %v461
  %548 = vmatprep.subr.bf16.mxu0 %v464
  %549 = vmatpush1.bf16.msra.mxu0 %v463
  %550 = vmatprep.subr.bf16.mxu0 %v466
  %551 = vmatpush1.bf16.msra.mxu0 %v465
  %552 = vmatprep.subr.bf16.mxu0 %v468
  %553 = vmatpush1.bf16.msra.mxu0 %v467
  %554 = vmatprep.subr.bf16.mxu0 %v470
  %555 = vmatpush1.bf16.msra.mxu0 %v469
  %556 = vmatprep.subr.bf16.mxu0 %v472
  %557 = vmatpush1.bf16.msra.mxu0 %v471
  %558 = vmatprep.subr.bf16.mxu0 %v474
  %559 = vmatpush1.bf16.msra.mxu0 %v473
  %560 = vmatprep.subr.bf16.mxu0 %v476
  %561 = vmatpush1.bf16.msra.mxu0 %v475
  %562 = vmatprep.subr.bf16.mxu0 %v478
  %563 = vmatpush1.bf16.msra.mxu0 %v477
  %564 = vmatprep.mubr.bf16.mxu0 %v281
  %565 = vmatmul.mubr.bf16.gmra.mrb[0].mxu0 %v280
  %v566 = vpop.f32.mrb[0].mxu0
  %v567 = vadd.f32 %v326, %v566
  %v568 = vpop.f32.mrb[0].mxu0
  %v569 = vadd.f32 %v330, %v568
  %v570 = vpop.f32.mrb[0].mxu0
  %v571 = vpop.f32.mrb[0].mxu0
  %572 = vdwg.mxu0
  %573 = vmatprep.subr.bf16.mxu0 %v480
  %574 = vmatpush1.bf16.msra.mxu0 %v479
  %575 = vmatprep.subr.bf16.mxu0 %v482
  %576 = vmatpush1.bf16.msra.mxu0 %v481
  %577 = vmatprep.subr.bf16.mxu0 %v530
  %578 = vmatpush1.bf16.msra.mxu0 %v527
  %579 = vmatprep.subr.bf16.mxu0 0
  %580 = vmatpush1.bf16.msra.mxu0 0
  %581 = vmatprep.subr.bf16.mxu0 0
  %582 = vmatpush1.bf16.msra.mxu0 0
  %583 = vmatprep.subr.bf16.mxu0 0
  %584 = vmatpush1.bf16.msra.mxu0 0
  %585 = vmatprep.subr.bf16.mxu0 0
  %586 = vmatpush1.bf16.msra.mxu0 0
  %587 = vmatprep.subr.bf16.mxu0 0
  %588 = vmatpush1.bf16.msra.mxu0 0
  %589 = vmatprep.subr.bf16.mxu0 0
  %590 = vmatpush1.bf16.msra.mxu0 0
  %591 = vmatprep.subr.bf16.mxu0 0
  %592 = vmatpush1.bf16.msra.mxu0 0
  %593 = vmatprep.subr.bf16.mxu0 0
  %594 = vmatpush1.bf16.msra.mxu0 0
  %595 = vmatprep.subr.bf16.mxu0 0
  %596 = vmatpush1.bf16.msra.mxu0 0
  %597 = vmatprep.subr.bf16.mxu0 0
  %598 = vmatpush1.bf16.msra.mxu0 0
  %599 = vmatprep.subr.bf16.mxu0 0
  %600 = vmatpush1.bf16.msra.mxu0 0
  %601 = vmatprep.subr.bf16.mxu0 0
  %602 = vmatpush1.bf16.msra.mxu0 0
  %603 = vmatprep.subr.bf16.mxu0 0
  %604 = vmatpush1.bf16.msra.mxu0 0
  %605 = vmatprep.mubr.bf16.mxu0 0
  %606 = vmatmul.mubr.bf16.gmra.mrb[0].mxu0 %v523
  %v607 = vpop.f32.mrb[0].mxu0
  %v608 = vadd.f32 %v567, %v607
  %v609 = vpop.f32.mrb[0].mxu0
  %v610 = vadd.f32 %v569, %v609
  %v611 = vpop.f32.mrb[0].mxu0
  %v612 = vpop.f32.mrb[0].mxu0
  %613 = vdwg.mxu0
  %v614 = vmax.f32 %v608, 0.0
  %v615 = vmax.f32 %v610, 0.0
  %v616 = vld [vmem:[%s7] sm:$0x3]
  %v618 = vlaneseq
  %v619 = vshrl.u32 %v618, 7
  %v620 = vsub.s32 0, %v619
  %v621 = vrot.slane %v616, %v620
  %v622 = vlaneseq
  %v623 = vshrl.u32 %v622, 7
  %v624 = vsub.s32 1, %v623
  %v625 = vrot.slane %v616, %v624
  %v628 = vmul.f32 %v614, %v621
  %v629 = vmul.f32 %v615, %v625
  %vm630 = vcmask 588800
  %v631 = vsel %vm630, %v629, 0.0
  %v632 = vadd.f32 %v628, %v631
  %633 = vadd.xlane.f32.xlu0 %v632
  %v634 = vpop.xlane.xlu0 %633
  %v635 = vld [vmem:[#allocation2] sm:$0x1]
  %v637 = vlaneseq
  %v638 = vshrl.u32 %v637, 7
  %v639 = vsub.s32 0, %v638
  %v640 = vrot.slane %v635, %v639
  %v642 = vadd.f32 %v634, %v640
  %vm643 = vcmask 7168
  %644 = vst.msk [vmem:[%s9] sm:$0xff] %vm643, %v642
  // Predicated region
  $region38: #{critic_forward.1} parent=0 // pred_check
    _
  $region39: #{critic_forward.1} parent=0 // pred_check_branch
    %646 = sbr.rel (0) target = $region41
  $region40: #{critic_forward.1} parent=0 // pred_region
    _
  $region41: #{critic_forward.1} parent=0 // pred_fallthru
    _
  // Predicated region
  $region42: #{critic_forward.1} parent=0 // pred_check
    _
  $region43: #{critic_forward.1} parent=0 // pred_check_branch
    %648 = sbr.rel (0) target = $region45
  $region44: #{critic_forward.1} parent=0 // pred_region
    _
  $region45: #{critic_forward.1} parent=0 // pred_fallthru
    _

</llo_original>
